<compile_context>
chip_gen: v7x
topology: tpu7x:2x2x1
jax: 0.10.0
libtpu: 0.0.40
codegen_flags: <defaults>
</compile_context>

<pallas_src>
import functools

import jax
import jax.numpy as jnp
from jax.experimental import pallas as pl
from jax.experimental.pallas import tpu as pltpu

LANE = 128
SUBLANE = 8


def _round_up(n, m):
    return ((n + m - 1) // m) * m


# ----------------------------------------------------------------------------- kernel


def qnet_kernel(x_ref, w1_ref, b1_ref, w2_ref, b2_ref, w3_ref, b3_ref, o_ref):
    # Hoist bias loads once per grid step.
    b1 = b1_ref[...]
    b2 = b2_ref[...]
    b3 = b3_ref[...]
    # Hidden layer 1: Linear + ReLU (f32 accumulation on the MXU).
    h = jnp.dot(x_ref[...], w1_ref[...], preferred_element_type=jnp.float32)
    h = jnp.maximum(h + b1, 0.0)
    # Hidden layer 2: Linear + ReLU.
    h = jnp.dot(h, w2_ref[...], preferred_element_type=jnp.float32)
    h = jnp.maximum(h + b2, 0.0)
    # Output layer: Linear (no activation). dim_out is unpadded -> narrow masked
    # store, but the HBM writeback is only the real columns.
    out = jnp.dot(h, w3_ref[...], preferred_element_type=jnp.float32) + b3
    o_ref[...] = out.astype(o_ref.dtype)


# --------------------------------------------------------------------- tiling helpers


@functools.lru_cache(maxsize=None)
def _vmem_limit_and_budget():
    phys = 64 * 1024 * 1024  # conservative default: v7x has the smallest VMEM (64 MiB/TC)
    try:
        phys = int(pltpu.get_tpu_info().vmem_capacity_bytes)
    except Exception:  # query unavailable -> stay conservative
        pass
    limit = min(64 * 1024 * 1024, (phys * 3) // 4)  # 64 MiB on v5e/v6e, 48 MiB on v7x
    budget = limit - 8 * 1024 * 1024                # headroom for compiler-internal scratch
    return limit, budget


def _vmem_bytes(tb, dim_in, h1, h2, dim_out):
    """Conservative VMEM estimate: every buffer occupies full (8,128) f32 tiles."""
    f32 = 4
    dil = _round_up(dim_in, LANE)
    h1l = _round_up(h1, LANE)
    h2l = _round_up(h2, LANE)
    dol = _round_up(dim_out, LANE)
    x_tile = 2 * tb * dil * f32                      # double-buffered input tile
    o_tile = 2 * tb * dol * f32                      # double-buffered output tile
    acts = 2 * tb * (h1l + h2l) * f32                # pre/post-activation intermediates
    weights = 2 * f32 * (_round_up(dim_in, SUBLANE) * h1l + h1l * h2l + h2l * dol)
    biases = 2 * f32 * SUBLANE * (h1l + h2l + dol)
    return x_tile + o_tile + acts + weights + biases


def _pick_block_batch(requested_tb, batch, dim_in, h1, h2, dim_out,
                      vmem_budget_bytes, min_grid_steps=4):
    """Largest batch tile (multiple of 8) that fits VMEM and leaves >= min_grid_steps
    grid steps so the 'parallel' batch axis can be sharded across TensorCores."""
    cap = max(SUBLANE, _round_up(pl.cdiv(batch, min_grid_steps), SUBLANE))
    tb = max(SUBLANE, min(_round_up(requested_tb, SUBLANE), cap))
    while tb > SUBLANE and _vmem_bytes(tb, dim_in, h1, h2, dim_out) > vmem_budget_bytes:
        tb = _round_up(max(tb // 2, SUBLANE), SUBLANE)
    return tb


def _fit_tile_to_batch(tb, batch):
    """Prefer a tile that exactly divides the (sublane-aligned) batch so the wrapper
    never materializes a padded copy of x on every call."""
    bp = _round_up(batch, SUBLANE)
    t = (tb // SUBLANE) * SUBLANE
    while t >= SUBLANE and bp % t != 0:
        t -= SUBLANE
    if t >= SUBLANE and 2 * t >= tb:
        return t, bp
    return tb, _round_up(bp, tb)  # fall back to padding the batch once per call


# ----------------------------------------------------------------------------- forward


def prepare_qnet_params(w1, b1, w2, b2, w3, b3):
    """Pad hidden widths up to 128 lanes ONCE (outside the per-step forward).

    Zero columns/rows + zero bias + ReLU(0)=0 keep the math exact. The output
    width (dim_out) is deliberately left UNPADDED so the kernel's HBM writeback
    stays at the real width. Weights are in (in, out) layout; biases become (1, H).
    """
    h1 = w1.shape[1]
    h2 = w2.shape[1]
    h1p = _round_up(h1, LANE)
    h2p = _round_up(h2, LANE)
    w1p = jnp.pad(w1.astype(jnp.float32), ((0, 0), (0, h1p - h1)))
    b1p = jnp.pad(b1.astype(jnp.float32).reshape(1, -1), ((0, 0), (0, h1p - h1)))
    w2p = jnp.pad(w2.astype(jnp.float32), ((0, h1p - h1), (0, h2p - h2)))
    b2p = jnp.pad(b2.astype(jnp.float32).reshape(1, -1), ((0, 0), (0, h2p - h2)))
    w3p = jnp.pad(w3.astype(jnp.float32), ((0, h2p - h2), (0, 0)))
    b3p = b3.astype(jnp.float32).reshape(1, -1)
    return w1p, b1p, w2p, b2p, w3p, b3p


@functools.partial(jax.jit, static_argnames=("block_batch",))
def qnet_forward(x, w1, b1, w2, b2, w3, b3, block_batch=8192):
    """y = relu(relu(x @ w1 + b1) @ w2 + b2) @ w3 + b3 (params from prepare_qnet_params)."""
    batch, dim_in = x.shape
    h1p = w1.shape[1]
    h2p = w2.shape[1]
    dim_out = w3.shape[1]
    b1 = b1.reshape(1, h1p)
    b2 = b2.reshape(1, h2p)
    b3 = b3.reshape(1, dim_out)

    vmem_limit, vmem_budget = _vmem_limit_and_budget()
    tb = _pick_block_batch(block_batch, batch, dim_in, h1p, h2p, dim_out, vmem_budget)
    tb, bp = _fit_tile_to_batch(tb, batch)

    if bp != batch:
        # Only hit when no reasonable tile divides the batch; common batch sizes
        # (multiples of 8 / powers of two) never take this path.
        x = jnp.pad(x, ((0, bp - batch), (0, 0)))

    grid = (bp // tb,)
    out = pl.pallas_call(
        qnet_kernel,
        out_shape=jax.ShapeDtypeStruct((bp, dim_out), jnp.float32),
        grid_spec=pltpu.PrefetchScalarGridSpec(
            num_scalar_prefetch=0,
            grid=grid,
            in_specs=[
                pl.BlockSpec((tb, dim_in), lambda i: (i, 0)),    # x: tiled along batch
                pl.BlockSpec((dim_in, h1p), lambda i: (0, 0)),   # weights/biases: VMEM-resident
                pl.BlockSpec((1, h1p), lambda i: (0, 0)),
                pl.BlockSpec((h1p, h2p), lambda i: (0, 0)),
                pl.BlockSpec((1, h2p), lambda i: (0, 0)),
                pl.BlockSpec((h2p, dim_out), lambda i: (0, 0)),  # output width unpadded
                pl.BlockSpec((1, dim_out), lambda i: (0, 0)),
            ],
            out_specs=pl.BlockSpec((tb, dim_out), lambda i: (i, 0)),
        ),
        compiler_params=pltpu.CompilerParams(
            dimension_semantics=("parallel",),   # shard batch tiles across TCs (v7x)
            vmem_limit_bytes=vmem_limit,
        ),
    )(x, w1, b1, w2, b2, w3, b3)

    return out if bp == batch else out[:batch]


# ----------------------------------------------------------------------- init / reference


def init_linear_params(key, fan_in, fan_out):
    """PyTorch nn.Linear-style init (U[-1/sqrt(fan_in), 1/sqrt(fan_in)]).

    Weight is returned pre-transposed as (fan_in, fan_out); bias as (fan_out,)."""
    kw, kb = jax.random.split(key)
    bound = 1.0 / jnp.sqrt(jnp.float32(fan_in))
    w = jax.random.uniform(kw, (fan_in, fan_out), jnp.float32, -bound, bound)
    b = jax.random.uniform(kb, (fan_out,), jnp.float32, -bound, bound)
    return w, b


def reference_forward(x, w1, b1, w2, b2, w3, b3):
    h = jnp.maximum(x @ w1 + b1, 0.0)
    h = jnp.maximum(h @ w2 + b2, 0.0)
    return h @ w3 + b3


if __name__ == "__main__":
    # QNet(dim_in=4, hidden_sizes=[32, 32], dim_out=2)  (e.g. CartPole-like)
    batch, dim_in, hidden, dim_out = 256, 4, [32, 32], 2

    key = jax.random.PRNGKey(0)
    kx, k1, k2, k3 = jax.random.split(key, 4)

    x = jax.random.normal(kx, (batch, dim_in), jnp.float32)
    w1, b1 = init_linear_params(k1, dim_in, hidden[0])
    w2, b2 = init_linear_params(k2, hidden[0], hidden[1])
    w3, b3 = init_linear_params(k3, hidden[1], dim_out)

    # Pad/layout the parameters once, outside the per-step forward.
    params = prepare_qnet_params(w1, b1, w2, b2, w3, b3)

    # With batch=256 the tile is capped to 64 rows -> a 4-step batch grid
    # (>=2 steps per TensorCore on v7x).
    out = qnet_forward(x, *params)
    out = jax.block_until_ready(out)

    ref = reference_forward(x, w1, b1, w2, b2, w3, b3)
    assert out.shape == (batch, dim_out)
    assert jnp.allclose(out, ref, atol=1e-4, rtol=1e-4)

    print("KERNEL_OK")
</pallas_src>

<mosaic_0001>
module attributes {stable_mosaic.version = 11 : i64} {
  func.func @qnet_kernel(%arg0: i32, %arg1: memref<64x4xf32, #tpu.memory_space<vmem>>, %arg2: memref<4x128xf32, #tpu.memory_space<vmem>>, %arg3: memref<1x128xf32, #tpu.memory_space<vmem>>, %arg4: memref<128x128xf32, #tpu.memory_space<vmem>>, %arg5: memref<1x128xf32, #tpu.memory_space<vmem>>, %arg6: memref<128x2xf32, #tpu.memory_space<vmem>>, %arg7: memref<1x2xf32, #tpu.memory_space<vmem>>, %arg8: memref<64x2xf32, #tpu.memory_space<vmem>>) attributes {dimension_semantics = [#tpu.dimension_semantics<parallel>], iteration_bounds = array<i64: 4>, scalar_prefetch = 0 : i64, scratch_operands = 0 : i64, tpu.core_type = #tpu.core_type<tc>, window_params = [{transform_indices = @transform_0, window_bounds = array<i64: 64, 4>}, {pipeline_mode = #tpu.pipeline_mode<synchronous>, transform_indices = @transform_1, window_bounds = array<i64: 4, 128>}, {pipeline_mode = #tpu.pipeline_mode<synchronous>, transform_indices = @transform_2, window_bounds = array<i64: 1, 128>}, {pipeline_mode = #tpu.pipeline_mode<synchronous>, transform_indices = @transform_3, window_bounds = array<i64: 128, 128>}, {pipeline_mode = #tpu.pipeline_mode<synchronous>, transform_indices = @transform_4, window_bounds = array<i64: 1, 128>}, {pipeline_mode = #tpu.pipeline_mode<synchronous>, transform_indices = @transform_5, window_bounds = array<i64: 128, 2>}, {pipeline_mode = #tpu.pipeline_mode<synchronous>, transform_indices = @transform_6, window_bounds = array<i64: 1, 2>}, {transform_indices = @transform_7, window_bounds = array<i64: 64, 2>}]} {
    %c0 = arith.constant 0 : index
    %c0_0 = arith.constant 0 : index
    %0 = vector.load %arg3[%c0, %c0_0] : memref<1x128xf32, #tpu.memory_space<vmem>>, vector<1x128xf32>
    %c0_1 = arith.constant 0 : index
    %c0_2 = arith.constant 0 : index
    %1 = vector.load %arg5[%c0_1, %c0_2] : memref<1x128xf32, #tpu.memory_space<vmem>>, vector<1x128xf32>
    %c0_3 = arith.constant 0 : index
    %c0_4 = arith.constant 0 : index
    %2 = vector.load %arg7[%c0_3, %c0_4] : memref<1x2xf32, #tpu.memory_space<vmem>>, vector<1x2xf32>
    %c0_5 = arith.constant 0 : index
    %c0_6 = arith.constant 0 : index
    %3 = vector.load %arg1[%c0_5, %c0_6] : memref<64x4xf32, #tpu.memory_space<vmem>>, vector<64x4xf32>
    %c0_7 = arith.constant 0 : index
    %c0_8 = arith.constant 0 : index
    %4 = vector.load %arg2[%c0_7, %c0_8] : memref<4x128xf32, #tpu.memory_space<vmem>>, vector<4x128xf32>
    %cst = arith.constant dense<0.000000e+00> : vector<64x128xf32>
    %5 = tpu.matmul %3, %4, %cst {dimension_numbers = #tpu.dot_dimension_numbers<[1], [0], [0], [1], [0, 0, 1, 1], [], []>} : vector<64x4xf32>, vector<4x128xf32>, vector<64x128xf32> -> vector<64x128xf32>
    %6 = vector.broadcast %0 : vector<1x128xf32> to vector<64x128xf32>
    %7 = arith.addf %5, %6 : vector<64x128xf32>
    %cst_9 = arith.constant 0.000000e+00 : f32
    %8 = vector.broadcast %cst_9 : f32 to vector<64x128xf32>
    %9 = arith.maximumf %7, %8 : vector<64x128xf32>
    %c0_10 = arith.constant 0 : index
    %c0_11 = arith.constant 0 : index
    %10 = vector.load %arg4[%c0_10, %c0_11] : memref<128x128xf32, #tpu.memory_space<vmem>>, vector<128x128xf32>
    %cst_12 = arith.constant dense<0.000000e+00> : vector<64x128xf32>
    %11 = tpu.matmul %9, %10, %cst_12 {dimension_numbers = #tpu.dot_dimension_numbers<[1], [0], [0], [1], [0, 0, 1, 1], [], []>} : vector<64x128xf32>, vector<128x128xf32>, vector<64x128xf32> -> vector<64x128xf32>
    %12 = vector.broadcast %1 : vector<1x128xf32> to vector<64x128xf32>
    %13 = arith.addf %11, %12 : vector<64x128xf32>
    %cst_13 = arith.constant 0.000000e+00 : f32
    %14 = vector.broadcast %cst_13 : f32 to vector<64x128xf32>
    %15 = arith.maximumf %13, %14 : vector<64x128xf32>
    %c0_14 = arith.constant 0 : index
    %c0_15 = arith.constant 0 : index
    %16 = vector.load %arg6[%c0_14, %c0_15] : memref<128x2xf32, #tpu.memory_space<vmem>>, vector<128x2xf32>
    %cst_16 = arith.constant dense<0.000000e+00> : vector<64x2xf32>
    %17 = tpu.matmul %15, %16, %cst_16 {dimension_numbers = #tpu.dot_dimension_numbers<[1], [0], [0], [1], [0, 0, 1, 1], [], []>} : vector<64x128xf32>, vector<128x2xf32>, vector<64x2xf32> -> vector<64x2xf32>
    %18 = vector.broadcast %2 : vector<1x2xf32> to vector<64x2xf32>
    %19 = arith.addf %17, %18 : vector<64x2xf32>
    %c0_17 = arith.constant 0 : index
    %c0_18 = arith.constant 0 : index
    %20 = vector.load %arg8[%c0_17, %c0_18] : memref<64x2xf32, #tpu.memory_space<vmem>>, vector<64x2xf32>
    tpu.vector_store %arg8[%c0_17, %c0_18], %19 {strides = array<i32>} : memref<64x2xf32, #tpu.memory_space<vmem>>, vector<64x2xf32>,
    return
  }
  func.func @transform_0(%arg0: i32) -> (i32, i32) {
    %c0_i32 = arith.constant 0 : i32
    %c0_i32_0 = arith.constant 0 : i32
    return %arg0, %c0_i32 : i32, i32
  }
  func.func @transform_1(%arg0: i32) -> (i32, i32) {
    %c0_i32 = arith.constant 0 : i32
    %c0_i32_0 = arith.constant 0 : i32
    %c0_i32_1 = arith.constant 0 : i32
    return %c0_i32, %c0_i32_0 : i32, i32
  }
  func.func @transform_2(%arg0: i32) -> (i32, i32) {
    %c0_i32 = arith.constant 0 : i32
    %c0_i32_0 = arith.constant 0 : i32
    %c0_i32_1 = arith.constant 0 : i32
    return %c0_i32, %c0_i32_0 : i32, i32
  }
  func.func @transform_3(%arg0: i32) -> (i32, i32) {
    %c0_i32 = arith.constant 0 : i32
    %c0_i32_0 = arith.constant 0 : i32
    %c0_i32_1 = arith.constant 0 : i32
    return %c0_i32, %c0_i32_0 : i32, i32
  }
  func.func @transform_4(%arg0: i32) -> (i32, i32) {
    %c0_i32 = arith.constant 0 : i32
    %c0_i32_0 = arith.constant 0 : i32
    %c0_i32_1 = arith.constant 0 : i32
    return %c0_i32, %c0_i32_0 : i32, i32
  }
  func.func @transform_5(%arg0: i32) -> (i32, i32) {
    %c0_i32 = arith.constant 0 : i32
    %c0_i32_0 = arith.constant 0 : i32
    %c0_i32_1 = arith.constant 0 : i32
    return %c0_i32, %c0_i32_0 : i32, i32
  }
  func.func @transform_6(%arg0: i32) -> (i32, i32) {
    %c0_i32 = arith.constant 0 : i32
    %c0_i32_0 = arith.constant 0 : i32
    %c0_i32_1 = arith.constant 0 : i32
    return %c0_i32, %c0_i32_0 : i32, i32
  }
  func.func @transform_7(%arg0: i32) -> (i32, i32) {
    %c0_i32 = arith.constant 0 : i32
    %c0_i32_0 = arith.constant 0 : i32
    return %arg0, %c0_i32 : i32, i32
  }
}

</mosaic_0001>

<llo_original>
// kernel: qnet_forward.1
$region0: #{qnet_forward.1}
  #allocation0 [shape = 'u32[]', space=smem, size = 0x4, offset = 0x4, fixed_abs, tag = 'smem constant byte address 0x4 - core index']
  #allocation1 [shape = 'u32[144,128]{1,0:T(1,128)}', space=vmem, size = 0x12000, scoped, tag = 'internal scratch']
  %s0 = inlined_call_operand.vmem [shape: f32[256,4], index: 0, kind: input, shape index: {}]
  %s1 = inlined_call_operand.vmem [shape: f32[4,128], index: 1, kind: input, shape index: {}]
  %s2 = inlined_call_operand.vmem [shape: f32[1,128], index: 2, kind: input, shape index: {}]
  %s3 = inlined_call_operand.vmem [shape: f32[128,128], index: 3, kind: input, shape index: {}]
  %s4 = inlined_call_operand.vmem [shape: f32[1,128], index: 4, kind: input, shape index: {}]
  %s5 = inlined_call_operand.vmem [shape: f32[128,2], index: 5, kind: input, shape index: {}]
  %s6 = inlined_call_operand.vmem [shape: f32[1,2], index: 6, kind: input, shape index: {}]
  %s7 = inlined_call_operand.vmem [shape: f32[256,2], index: 7, kind: output, shape index: {}]
  %s8 = sld [smem:[#allocation0]]
  $region61: #{qnet_forward.1} parent=0
    _
  %s10 = ssub.s32 1, %s8
  %s11 = scalar_select 0, %s10, %s8
  loop: start=0, step=1, limit=6
  $region2: #{qnet_forward.1} parent=0 // loop_pre_header
    _
  $region3: #{qnet_forward.1} parent=0 // loop_header
    %s13 = sphi 0, %s17
    %p14 = scmp.ge.s32.totalorder %s13, 6
    %s23 = sphi 0, %s25
    %s26 = sphi 0, %s23
    %s27 = sphi 0, %s26
    %s43 = sphi 0, %s27
    %s47 = sphi 0, %s47
    %s49 = sphi 0, %s47
    %s50 = sphi 0, %s49
    %s64 = sphi 0, %s50
    %s68 = sphi 0, %s68
    %s70 = sphi 0, %s68
    %s71 = sphi 0, %s70
    %s85 = sphi 0, %s71
    %s89 = sphi 0, %s89
    %s91 = sphi 0, %s89
    %s92 = sphi 0, %s91
    %s106 = sphi 0, %s92
    %s110 = sphi 0, %s110
    %s112 = sphi 0, %s110
    %s113 = sphi 0, %s112
    %s127 = sphi 0, %s113
    %s131 = sphi 0, %s131
    %s133 = sphi 0, %s131
    %s134 = sphi 0, %s133
    %s148 = sphi 0, %s134
    %s152 = sphi 0, %s152
    %s154 = sphi 0, %s152
    %s155 = sphi 0, %s154
    %s169 = sphi 0, %s155
    %s175 = sphi 0, %s177
    %s178 = sphi 0, %s175
    %s179 = sphi 0, %s178
    %s195 = sphi 0, %s179
  $region4: #{qnet_forward.1} parent=0 // loop_header_branch
    %16 = sbr.rel (%p14) target = $region8
  $region5: #{qnet_forward.1} parent=0 // loop_body
    %s18 = ssub.s32 %s13, 1
    %s19 = ssub.s32 %s13, 2
    %s20 = sadd.s32 %s13, 1
    %s21 = ssub.s32 %s13, %s20
    %p22 = scmp.eq.s32.totalorder %s21, 0
    %s24 = sadd.s32 %s23, 1
    %s25 = scalar_select %p22, %s23, %s24
    %p28 = pneg %p22
    %p29 = scmp.eq.s32.totalorder %s13, 3
    %p30 = por %p28, %p29
    %p31 = scmp.ne.s32.totalorder %s23, %s26
    %p32 = scmp.eq.s32.totalorder %s13, 0
    %p33 = por %p31, %p32
    %p34 = scmp.ne.s32.totalorder %s23, %s26
    %p35 = scmp.eq.s32.totalorder %s18, 3
    %p36 = por %p34, %p35
    %p37 = scmp.ne.s32.totalorder %s26, %s27
    %p38 = scmp.eq.s32.totalorder %s18, 0
    %p39 = por %p37, %p38
    %p40 = scmp.ne.s32.totalorder %s26, %s27
    %p41 = scmp.eq.s32.totalorder %s19, 3
    %p42 = por %p40, %p41
    %p44 = scmp.ne.s32.totalorder %s27, %s43
    %p45 = scmp.eq.s32.totalorder %s19, 0
    %p46 = por %p44, %p45
    %s48 = sadd.s32 %s47, 1
    %p51 = scmp.eq.s32.totalorder %s13, 3
    %p52 = scmp.ne.s32.totalorder %s47, %s49
    %p53 = scmp.eq.s32.totalorder %s13, 0
    %p54 = por %p52, %p53
    %p55 = scmp.ne.s32.totalorder %s47, %s49
    %p56 = scmp.eq.s32.totalorder %s18, 3
    %p57 = por %p55, %p56
    %p58 = scmp.ne.s32.totalorder %s49, %s50
    %p59 = scmp.eq.s32.totalorder %s18, 0
    %p60 = por %p58, %p59
    %p61 = scmp.ne.s32.totalorder %s49, %s50
    %p62 = scmp.eq.s32.totalorder %s19, 3
    %p63 = por %p61, %p62
    %p65 = scmp.ne.s32.totalorder %s50, %s64
    %p66 = scmp.eq.s32.totalorder %s19, 0
    %p67 = por %p65, %p66
    %s69 = sadd.s32 %s68, 1
    %p72 = scmp.eq.s32.totalorder %s13, 3
    %p73 = scmp.ne.s32.totalorder %s68, %s70
    %p74 = scmp.eq.s32.totalorder %s13, 0
    %p75 = por %p73, %p74
    %p76 = scmp.ne.s32.totalorder %s68, %s70
    %p77 = scmp.eq.s32.totalorder %s18, 3
    %p78 = por %p76, %p77
    %p79 = scmp.ne.s32.totalorder %s70, %s71
    %p80 = scmp.eq.s32.totalorder %s18, 0
    %p81 = por %p79, %p80
    %p82 = scmp.ne.s32.totalorder %s70, %s71
    %p83 = scmp.eq.s32.totalorder %s19, 3
    %p84 = por %p82, %p83
    %p86 = scmp.ne.s32.totalorder %s71, %s85
    %p87 = scmp.eq.s32.totalorder %s19, 0
    %p88 = por %p86, %p87
    %s90 = sadd.s32 %s89, 1
    %p93 = scmp.eq.s32.totalorder %s13, 3
    %p94 = scmp.ne.s32.totalorder %s89, %s91
    %p95 = scmp.eq.s32.totalorder %s13, 0
    %p96 = por %p94, %p95
    %p97 = scmp.ne.s32.totalorder %s89, %s91
    %p98 = scmp.eq.s32.totalorder %s18, 3
    %p99 = por %p97, %p98
    %p100 = scmp.ne.s32.totalorder %s91, %s92
    %p101 = scmp.eq.s32.totalorder %s18, 0
    %p102 = por %p100, %p101
    %p103 = scmp.ne.s32.totalorder %s91, %s92
    %p104 = scmp.eq.s32.totalorder %s19, 3
    %p105 = por %p103, %p104
    %p107 = scmp.ne.s32.totalorder %s92, %s106
    %p108 = scmp.eq.s32.totalorder %s19, 0
    %p109 = por %p107, %p108
    %s111 = sadd.s32 %s110, 1
    %p114 = scmp.eq.s32.totalorder %s13, 3
    %p115 = scmp.ne.s32.totalorder %s110, %s112
    %p116 = scmp.eq.s32.totalorder %s13, 0
    %p117 = por %p115, %p116
    %p118 = scmp.ne.s32.totalorder %s110, %s112
    %p119 = scmp.eq.s32.totalorder %s18, 3
    %p120 = por %p118, %p119
    %p121 = scmp.ne.s32.totalorder %s112, %s113
    %p122 = scmp.eq.s32.totalorder %s18, 0
    %p123 = por %p121, %p122
    %p124 = scmp.ne.s32.totalorder %s112, %s113
    %p125 = scmp.eq.s32.totalorder %s19, 3
    %p126 = por %p124, %p125
    %p128 = scmp.ne.s32.totalorder %s113, %s127
    %p129 = scmp.eq.s32.totalorder %s19, 0
    %p130 = por %p128, %p129
    %s132 = sadd.s32 %s131, 1
    %p135 = scmp.eq.s32.totalorder %s13, 3
    %p136 = scmp.ne.s32.totalorder %s131, %s133
    %p137 = scmp.eq.s32.totalorder %s13, 0
    %p138 = por %p136, %p137
    %p139 = scmp.ne.s32.totalorder %s131, %s133
    %p140 = scmp.eq.s32.totalorder %s18, 3
    %p141 = por %p139, %p140
    %p142 = scmp.ne.s32.totalorder %s133, %s134
    %p143 = scmp.eq.s32.totalorder %s18, 0
    %p144 = por %p142, %p143
    %p145 = scmp.ne.s32.totalorder %s133, %s134
    %p146 = scmp.eq.s32.totalorder %s19, 3
    %p147 = por %p145, %p146
    %p149 = scmp.ne.s32.totalorder %s134, %s148
    %p150 = scmp.eq.s32.totalorder %s19, 0
    %p151 = por %p149, %p150
    %s153 = sadd.s32 %s152, 1
    %p156 = scmp.eq.s32.totalorder %s13, 3
    %p157 = scmp.ne.s32.totalorder %s152, %s154
    %p158 = scmp.eq.s32.totalorder %s13, 0
    %p159 = por %p157, %p158
    %p160 = scmp.ne.s32.totalorder %s152, %s154
    %p161 = scmp.eq.s32.totalorder %s18, 3
    %p162 = por %p160, %p161
    %p163 = scmp.ne.s32.totalorder %s154, %s155
    %p164 = scmp.eq.s32.totalorder %s18, 0
    %p165 = por %p163, %p164
    %p166 = scmp.ne.s32.totalorder %s154, %s155
    %p167 = scmp.eq.s32.totalorder %s19, 3
    %p168 = por %p166, %p167
    %p170 = scmp.ne.s32.totalorder %s155, %s169
    %p171 = scmp.eq.s32.totalorder %s19, 0
    %p172 = por %p170, %p171
    %s173 = ssub.s32 %s13, %s20
    %p174 = scmp.eq.s32.totalorder %s173, 0
    %s176 = sadd.s32 %s175, 1
    %s177 = scalar_select %p174, %s175, %s176
    %p180 = pneg %p174
    %p181 = scmp.eq.s32.totalorder %s13, 3
    %p182 = por %p180, %p181
    %p183 = scmp.ne.s32.totalorder %s175, %s178
    %p184 = scmp.eq.s32.totalorder %s13, 0
    %p185 = por %p183, %p184
    %p186 = scmp.ne.s32.totalorder %s175, %s178
    %p187 = scmp.eq.s32.totalorder %s18, 3
    %p188 = por %p186, %p187
    %p189 = scmp.ne.s32.totalorder %s178, %s179
    %p190 = scmp.eq.s32.totalorder %s18, 0
    %p191 = por %p189, %p190
    %p192 = scmp.ne.s32.totalorder %s178, %s179
    %p193 = scmp.eq.s32.totalorder %s19, 3
    %p194 = por %p192, %p193
    %p196 = scmp.ne.s32.totalorder %s179, %s195
    %p197 = scmp.eq.s32.totalorder %s19, 0
    %p198 = por %p196, %p197
    %p199 = scmp.le.s32.totalorder 1, %s13
    %p200 = scmp.lt.s32.totalorder %s13, 5
    %p201 = pnand %p199, %p200
    %p202 = pneg %p201
    // Predicated region
    $region9: #{qnet_forward.1} parent=5 // pred_check
      _
    $region10: #{qnet_forward.1} parent=5 // pred_check_branch
      %204 = sbr.rel (%p201) target = $region12
    $region11: #{qnet_forward.1} parent=5 // pred_region
      %s205 = ssub.s32 %s13, 1
      // Predicated region
      $region13: #{qnet_forward.1} parent=11 // pred_check
        %p206 = pneg %p60
      $region14: #{qnet_forward.1} parent=11 // pred_check_branch
        %208 = sbr.rel (%p206) target = $region16
      $region15: #{qnet_forward.1} parent=11 // pred_region
        _
      $region16: #{qnet_forward.1} parent=11 // pred_fallthru
        _
      // Predicated region
      $region17: #{qnet_forward.1} parent=11 // pred_check
        %p209 = pneg %p81
      $region18: #{qnet_forward.1} parent=11 // pred_check_branch
        %211 = sbr.rel (%p209) target = $region20
      $region19: #{qnet_forward.1} parent=11 // pred_region
        _
      $region20: #{qnet_forward.1} parent=11 // pred_fallthru
        _
      // Predicated region
      $region21: #{qnet_forward.1} parent=11 // pred_check
        %p212 = pneg %p102
      $region22: #{qnet_forward.1} parent=11 // pred_check_branch
        %214 = sbr.rel (%p212) target = $region24
      $region23: #{qnet_forward.1} parent=11 // pred_region
        _
      $region24: #{qnet_forward.1} parent=11 // pred_fallthru
        _
      // Predicated region
      $region25: #{qnet_forward.1} parent=11 // pred_check
        %p215 = pneg %p123
      $region26: #{qnet_forward.1} parent=11 // pred_check_branch
        %217 = sbr.rel (%p215) target = $region28
      $region27: #{qnet_forward.1} parent=11 // pred_region
        _
      $region28: #{qnet_forward.1} parent=11 // pred_fallthru
        _
      // Predicated region
      $region29: #{qnet_forward.1} parent=11 // pred_check
        %p218 = pneg %p144
      $region30: #{qnet_forward.1} parent=11 // pred_check_branch
        %220 = sbr.rel (%p218) target = $region32
      $region31: #{qnet_forward.1} parent=11 // pred_region
        _
      $region32: #{qnet_forward.1} parent=11 // pred_fallthru
        _
      // Predicated region
      $region33: #{qnet_forward.1} parent=11 // pred_check
        %p221 = pneg %p165
      $region34: #{qnet_forward.1} parent=11 // pred_check_branch
        %223 = sbr.rel (%p221) target = $region36
      $region35: #{qnet_forward.1} parent=11 // pred_region
        _
      $region36: #{qnet_forward.1} parent=11 // pred_fallthru
        _
    $region12: #{qnet_forward.1} parent=5 // pred_fallthru
      _
    %p224 = scmp.lt.s32.totalorder %s13, 4
    // Predicated region
    $region37: #{qnet_forward.1} parent=5 // pred_check
      %p225 = pneg %p224
    $region38: #{qnet_forward.1} parent=5 // pred_check_branch
      %227 = sbr.rel (%p225) target = $region40
    $region39: #{qnet_forward.1} parent=5 // pred_region
      // Predicated region
      $region41: #{qnet_forward.1} parent=39 // pred_check
        %p228 = pneg %p33
      $region42: #{qnet_forward.1} parent=39 // pred_check_branch
        %230 = sbr.rel (%p228) target = $region44
      $region43: #{qnet_forward.1} parent=39 // pred_region
        %s231 = smul.u32 8, %s13
        %p232 = scmp.lt.s32.totalorder %s231, 31
        %s233 = scalar_select %p232, %s231, 31
        %s234 = smul.addr %s233, 8
        %s235 = scalar_lea.vmem %s0, %s234
        %s236 = smul.u32 8, %s13
      $region44: #{qnet_forward.1} parent=39 // pred_fallthru
        _
    $region40: #{qnet_forward.1} parent=5 // pred_fallthru
      _
    %p237 = scmp.le.s32.totalorder 1, %s13
    %p238 = scmp.lt.s32.totalorder %s13, 5
    %p239 = pnand %p237, %p238
    %p240 = pneg %p239
    // Predicated region
    $region45: #{qnet_forward.1} parent=5 // pred_check
      _
    $region46: #{qnet_forward.1} parent=5 // pred_check_branch
      %242 = sbr.rel (%p239) target = $region48
    $region47: #{qnet_forward.1} parent=5 // pred_region
      %s243 = ssub.s32 %s13, 1
      %s244 = smul.u32 8, %s18
      %p245 = scmp.lt.s32.totalorder %s244, 31
      %s246 = scalar_select %p245, %s244, 31
      %s247 = smul.addr %s246, 8
      %s248 = scalar_lea.vmem %s0, %s247
      %p249 = pneg %p39
      %p250 = pneg %p36
      %p251 = pneg %p60
      %p252 = pneg %p57
      %p253 = pneg %p81
      %p254 = pneg %p78
      %p255 = pneg %p102
      %p256 = pneg %p99
      %p257 = pneg %p123
      %p258 = pneg %p120
      %p259 = pneg %p144
      %p260 = pneg %p141
      %p261 = pneg %p165
      %p262 = pneg %p162
      %p263 = pneg %p191
      %p264 = pneg %p188
      %s265 = smul.u32 8, %s18
      %p266 = scmp.lt.s32.totalorder %s265, 31
      %s267 = scalar_select %p266, %s265, 31
      %s268 = smul.addr %s267, 8
      %s269 = scalar_lea.vmem %s7, %s268
      %s270 = smul.u32 8, %s18
      %p271 = scmp.lt.s32.totalorder %s270, 31
      %s272 = scalar_select %p271, %s270, 31
      %s273 = smul.addr %s272, 8
      %s274 = scalar_lea.vmem %s0, %s273
      %s275 = smul.u32 8, %s18
      %s276 = smul.u32 8, %s18
      %p277 = scmp.lt.s32.totalorder %s276, 31
      %s278 = scalar_select %p277, %s276, 31
      %s279 = smul.addr %s278, 8
      %s280 = scalar_lea.vmem %s7, %s279
      %s281 = smul.u32 8, %s18
      %v282 = vld [vmem:[%s2] sm:$0x1]
      %v283 = vld [vmem:[%s4] sm:$0x1]
      %v284 = vld [vmem:[%s6] sm:$0x1]
      %v285 = vld [vmem:[%s274] sm:$0xff]
      %v286 = vld [vmem:[%s274 + $0x8] sm:$0xff]
      %v287 = vld [vmem:[%s274 + $0x10] sm:$0xff]
      %v288 = vld [vmem:[%s274 + $0x18] sm:$0xff]
      %v289 = vld [vmem:[%s274 + $0x20] sm:$0xff]
      %v290 = vld [vmem:[%s274 + $0x28] sm:$0xff]
      %v291 = vld [vmem:[%s274 + $0x30] sm:$0xff]
      %v292 = vld [vmem:[%s274 + $0x38] sm:$0xff]
      %v293 = vld [vmem:[%s1] sm:$0xf]
      %v295 = vlaneseq
      %v296 = vshrl.u32 %v295, 7
      %v297 = vsub.s32 0, %v296
      %v298 = vrot.slane %v282, %v297
      %vm300 = vcmask 31744
      %v302 = vsel %vm300, %v285, 0
      %v305 = vsel %vm300, %v286, 0
      %v308 = vsel %vm300, %v287, 0
      %v311 = vsel %vm300, %v288, 0
      %v314 = vsel %vm300, %v289, 0
      %v317 = vsel %vm300, %v290, 0
      %v320 = vsel %vm300, %v291, 0
      %v323 = vsel %vm300, %v292, 0
      %vm325 = vcmask 1043456
      %v327 = vsel %vm325, %v293, 0
      %329 = vmatprep.subr.mxu0 0.0
      %330 = vmatpush1.msra.mxu0 %v327
      %331 = vmatprep.subr.mxu0 0.0
      %332 = vmatpush1.msra.mxu0 0.0
      %333 = vmatprep.subr.mxu0 0.0
      %334 = vmatpush1.msra.mxu0 0.0
      %335 = vmatprep.subr.mxu0 0.0
      %336 = vmatpush1.msra.mxu0 0.0
      %337 = vmatprep.subr.mxu0 0.0
      %338 = vmatpush1.msra.mxu0 0.0
      %339 = vmatprep.subr.mxu0 0.0
      %340 = vmatpush1.msra.mxu0 0.0
      %341 = vmatprep.subr.mxu0 0.0
      %342 = vmatpush1.msra.mxu0 0.0
      %343 = vmatprep.subr.mxu0 0.0
      %344 = vmatpush1.msra.mxu0 0.0
      %345 = vmatprep.subr.mxu0 0.0
      %346 = vmatpush1.msra.mxu0 0.0
      %347 = vmatprep.subr.mxu0 0.0
      %348 = vmatpush1.msra.mxu0 0.0
      %349 = vmatprep.subr.mxu0 0.0
      %350 = vmatpush1.msra.mxu0 0.0
      %351 = vmatprep.subr.mxu0 0.0
      %352 = vmatpush1.msra.mxu0 0.0
      %353 = vmatprep.subr.mxu0 0.0
      %354 = vmatpush1.msra.mxu0 0.0
      %355 = vmatprep.subr.mxu0 0.0
      %356 = vmatpush1.msra.mxu0 0.0
      %357 = vmatprep.subr.mxu0 0.0
      %358 = vmatpush1.msra.mxu0 0.0
      %359 = vmatprep.subr.mxu0 0.0
      %360 = vmatpush1.msra.mxu0 0.0
      %361 = vmatprep.subr.mxu0 0.0
      %362 = vmatpush1.msra.mxu0 0.0
      %363 = vmatprep.subr.mxu0 0.0
      %364 = vmatpush1.msra.mxu0 0.0
      %365 = vmatprep.subr.mxu0 0.0
      %366 = vmatpush1.msra.mxu0 0.0
      %367 = vmatprep.subr.mxu0 0.0
      %368 = vmatpush1.msra.mxu0 0.0
      %369 = vmatprep.subr.mxu0 0.0
      %370 = vmatpush1.msra.mxu0 0.0
      %371 = vmatprep.subr.mxu0 0.0
      %372 = vmatpush1.msra.mxu0 0.0
      %373 = vmatprep.subr.mxu0 0.0
      %374 = vmatpush1.msra.mxu0 0.0
      %375 = vmatprep.subr.mxu0 0.0
      %376 = vmatpush1.msra.mxu0 0.0
      %377 = vmatprep.subr.mxu0 0.0
      %378 = vmatpush1.msra.mxu0 0.0
      %379 = vmatprep.subr.mxu0 0.0
      %380 = vmatpush1.msra.mxu0 0.0
      %381 = vmatprep.subr.mxu0 0.0
      %382 = vmatpush1.msra.mxu0 0.0
      %383 = vmatprep.subr.mxu0 0.0
      %384 = vmatpush1.msra.mxu0 0.0
      %385 = vmatprep.subr.mxu0 0.0
      %386 = vmatpush1.msra.mxu0 0.0
      %387 = vmatprep.subr.mxu0 0.0
      %388 = vmatpush1.msra.mxu0 0.0
      %389 = vmatprep.subr.mxu0 0.0
      %390 = vmatpush1.msra.mxu0 0.0
      %391 = vmatprep.subr.mxu0 0.0
      %392 = vmatpush1.msra.mxu0 0.0
      %393 = vmatprep.mubr.f32.mxu0 0.0
      %394 = vmatmul.mubr.f32.gmra.mrb[0].mxu0 %v302
      %v395 = vpop.f32.mrb[0].mxu0
      %v396 = vadd.f32 %v298, %v395
      %v397 = vpop.f32.mrb[0].mxu0
      %398 = vmatprep.mubr.f32.mxu0 0.0
      %399 = vmatmul.mubr.f32.gmra.mrb[0].mxu0 %v305
      %v400 = vpop.f32.mrb[0].mxu0
      %v401 = vadd.f32 %v298, %v400
      %v402 = vpop.f32.mrb[0].mxu0
      %403 = vmatprep.mubr.f32.mxu0 0.0
      %404 = vmatmul.mubr.f32.gmra.mrb[0].mxu0 %v308
      %v405 = vpop.f32.mrb[0].mxu0
      %v406 = vadd.f32 %v298, %v405
      %v407 = vpop.f32.mrb[0].mxu0
      %408 = vmatprep.mubr.f32.mxu0 0.0
      %409 = vmatmul.mubr.f32.gmra.mrb[0].mxu0 %v311
      %v410 = vpop.f32.mrb[0].mxu0
      %v411 = vadd.f32 %v298, %v410
      %v412 = vpop.f32.mrb[0].mxu0
      %413 = vmatprep.mubr.f32.mxu0 0.0
      %414 = vmatmul.mubr.f32.gmra.mrb[0].mxu0 %v314
      %v415 = vpop.f32.mrb[0].mxu0
      %v416 = vadd.f32 %v298, %v415
      %v417 = vpop.f32.mrb[0].mxu0
      %418 = vmatprep.mubr.f32.mxu0 0.0
      %419 = vmatmul.mubr.f32.gmra.mrb[0].mxu0 %v317
      %v420 = vpop.f32.mrb[0].mxu0
      %v421 = vadd.f32 %v298, %v420
      %v422 = vpop.f32.mrb[0].mxu0
      %423 = vmatprep.mubr.f32.mxu0 0.0
      %424 = vmatmul.mubr.f32.gmra.mrb[0].mxu0 %v320
      %v425 = vpop.f32.mrb[0].mxu0
      %v426 = vadd.f32 %v298, %v425
      %v427 = vpop.f32.mrb[0].mxu0
      %428 = vmatprep.mubr.f32.mxu0 0.0
      %429 = vmatmul.mubr.f32.gmra.mrb[0].mxu0 %v323
      %v430 = vpop.f32.mrb[0].mxu0
      %v431 = vadd.f32 %v298, %v430
      %v432 = vpop.f32.mrb[0].mxu0
      %433 = vdwg.mxu0
      %v434 = vmax.f32 %v396, 0.0
      %v435 = vmax.f32 %v401, 0.0
      %v436 = vmax.f32 %v406, 0.0
      %v437 = vmax.f32 %v411, 0.0
      %v438 = vmax.f32 %v416, 0.0
      %v439 = vmax.f32 %v421, 0.0
      %v440 = vmax.f32 %v426, 0.0
      %v441 = vmax.f32 %v431, 0.0
      %v442 = vld [vmem:[%s3] sm:$0xff]
      %v443 = vld [vmem:[%s3 + $0x8] sm:$0xff]
      %v444 = vld [vmem:[%s3 + $0x10] sm:$0xff]
      %v445 = vld [vmem:[%s3 + $0x18] sm:$0xff]
      %v446 = vld [vmem:[%s3 + $0x20] sm:$0xff]
      %v447 = vld [vmem:[%s3 + $0x28] sm:$0xff]
      %v448 = vld [vmem:[%s3 + $0x30] sm:$0xff]
      %v449 = vld [vmem:[%s3 + $0x38] sm:$0xff]
      %v450 = vld [vmem:[%s3 + $0x40] sm:$0xff]
      %v451 = vld [vmem:[%s3 + $0x48] sm:$0xff]
      %v452 = vld [vmem:[%s3 + $0x50] sm:$0xff]
      %v453 = vld [vmem:[%s3 + $0x58] sm:$0xff]
      %v454 = vld [vmem:[%s3 + $0x60] sm:$0xff]
      %v455 = vld [vmem:[%s3 + $0x68] sm:$0xff]
      %v456 = vld [vmem:[%s3 + $0x70] sm:$0xff]
      %v457 = vld [vmem:[%s3 + $0x78] sm:$0xff]
      %v459 = vlaneseq
      %v460 = vshrl.u32 %v459, 7
      %v461 = vsub.s32 0, %v460
      %v462 = vrot.slane %v283, %v461
      %464 = vmatprep.subr.mxu0 0.0
      %465 = vmatpush1.msra.mxu0 %v442
      %466 = vmatprep.subr.mxu0 0.0
      %467 = vmatpush1.msra.mxu0 %v443
      %468 = vmatprep.subr.mxu0 0.0
      %469 = vmatpush1.msra.mxu0 %v444
      %470 = vmatprep.subr.mxu0 0.0
      %471 = vmatpush1.msra.mxu0 %v445
      %472 = vmatprep.subr.mxu0 0.0
      %473 = vmatpush1.msra.mxu0 %v446
      %474 = vmatprep.subr.mxu0 0.0
      %475 = vmatpush1.msra.mxu0 %v447
      %476 = vmatprep.subr.mxu0 0.0
      %477 = vmatpush1.msra.mxu0 %v448
      %478 = vmatprep.subr.mxu0 0.0
      %479 = vmatpush1.msra.mxu0 %v449
      %480 = vmatprep.subr.mxu0 0.0
      %481 = vmatpush1.msra.mxu0 %v450
      %482 = vmatprep.subr.mxu0 0.0
      %483 = vmatpush1.msra.mxu0 %v451
      %484 = vmatprep.subr.mxu0 0.0
      %485 = vmatpush1.msra.mxu0 %v452
      %486 = vmatprep.subr.mxu0 0.0
      %487 = vmatpush1.msra.mxu0 %v453
      %488 = vmatprep.subr.mxu0 0.0
      %489 = vmatpush1.msra.mxu0 %v454
      %490 = vmatprep.subr.mxu0 0.0
      %491 = vmatpush1.msra.mxu0 %v455
      %492 = vmatprep.subr.mxu0 0.0
      %493 = vmatpush1.msra.mxu0 %v456
      %494 = vmatprep.subr.mxu0 0.0
      %495 = vmatpush1.msra.mxu0 %v457
      %496 = vmatprep.subr.mxu0 0.0
      %497 = vmatpush1.msra.mxu0 0.0
      %498 = vmatprep.subr.mxu0 0.0
      %499 = vmatpush1.msra.mxu0 0.0
      %500 = vmatprep.subr.mxu0 0.0
      %501 = vmatpush1.msra.mxu0 0.0
      %502 = vmatprep.subr.mxu0 0.0
      %503 = vmatpush1.msra.mxu0 0.0
      %504 = vmatprep.subr.mxu0 0.0
      %505 = vmatpush1.msra.mxu0 0.0
      %506 = vmatprep.subr.mxu0 0.0
      %507 = vmatpush1.msra.mxu0 0.0
      %508 = vmatprep.subr.mxu0 0.0
      %509 = vmatpush1.msra.mxu0 0.0
      %510 = vmatprep.subr.mxu0 0.0
      %511 = vmatpush1.msra.mxu0 0.0
      %512 = vmatprep.subr.mxu0 0.0
      %513 = vmatpush1.msra.mxu0 0.0
      %514 = vmatprep.subr.mxu0 0.0
      %515 = vmatpush1.msra.mxu0 0.0
      %516 = vmatprep.subr.mxu0 0.0
      %517 = vmatpush1.msra.mxu0 0.0
      %518 = vmatprep.subr.mxu0 0.0
      %519 = vmatpush1.msra.mxu0 0.0
      %520 = vmatprep.subr.mxu0 0.0
      %521 = vmatpush1.msra.mxu0 0.0
      %522 = vmatprep.subr.mxu0 0.0
      %523 = vmatpush1.msra.mxu0 0.0
      %524 = vmatprep.subr.mxu0 0.0
      %525 = vmatpush1.msra.mxu0 0.0
      %526 = vmatprep.subr.mxu0 0.0
      %527 = vmatpush1.msra.mxu0 0.0
      %528 = vmatprep.mubr.f32.mxu0 0.0
      %529 = vmatmul.mubr.f32.gmra.mrb[0].mxu0 %v434
      %v530 = vpop.f32.mrb[0].mxu0
      %v531 = vadd.f32 %v462, %v530
      %v532 = vpop.f32.mrb[0].mxu0
      %533 = vmatprep.mubr.f32.mxu0 0.0
      %534 = vmatmul.mubr.f32.gmra.mrb[0].mxu0 %v435
      %v535 = vpop.f32.mrb[0].mxu0
      %v536 = vadd.f32 %v462, %v535
      %v537 = vpop.f32.mrb[0].mxu0
      %538 = vmatprep.mubr.f32.mxu0 0.0
      %539 = vmatmul.mubr.f32.gmra.mrb[0].mxu0 %v436
      %v540 = vpop.f32.mrb[0].mxu0
      %v541 = vadd.f32 %v462, %v540
      %v542 = vpop.f32.mrb[0].mxu0
      %543 = vmatprep.mubr.f32.mxu0 0.0
      %544 = vmatmul.mubr.f32.gmra.mrb[0].mxu0 %v437
      %v545 = vpop.f32.mrb[0].mxu0
      %v546 = vadd.f32 %v462, %v545
      %v547 = vpop.f32.mrb[0].mxu0
      %548 = vmatprep.mubr.f32.mxu0 0.0
      %549 = vmatmul.mubr.f32.gmra.mrb[0].mxu0 %v438
      %v550 = vpop.f32.mrb[0].mxu0
      %v551 = vadd.f32 %v462, %v550
      %v552 = vpop.f32.mrb[0].mxu0
      %553 = vmatprep.mubr.f32.mxu0 0.0
      %554 = vmatmul.mubr.f32.gmra.mrb[0].mxu0 %v439
      %v555 = vpop.f32.mrb[0].mxu0
      %v556 = vadd.f32 %v462, %v555
      %v557 = vpop.f32.mrb[0].mxu0
      %558 = vmatprep.mubr.f32.mxu0 0.0
      %559 = vmatmul.mubr.f32.gmra.mrb[0].mxu0 %v440
      %v560 = vpop.f32.mrb[0].mxu0
      %v561 = vadd.f32 %v462, %v560
      %v562 = vpop.f32.mrb[0].mxu0
      %563 = vmatprep.mubr.f32.mxu0 0.0
      %564 = vmatmul.mubr.f32.gmra.mrb[0].mxu0 %v441
      %v565 = vpop.f32.mrb[0].mxu0
      %v566 = vadd.f32 %v462, %v565
      %v567 = vpop.f32.mrb[0].mxu0
      %568 = vdwg.mxu0
      %v569 = vmax.f32 %v531, 0.0
      %v570 = vmax.f32 %v536, 0.0
      %v571 = vmax.f32 %v541, 0.0
      %v572 = vmax.f32 %v546, 0.0
      %v573 = vmax.f32 %v551, 0.0
      %v574 = vmax.f32 %v556, 0.0
      %v575 = vmax.f32 %v561, 0.0
      %v576 = vmax.f32 %v566, 0.0
      %v577 = vld [vmem:[%s5] sm:$0xff]
      %v578 = vld [vmem:[%s5 + $0x8] sm:$0xff]
      %v579 = vld [vmem:[%s5 + $0x10] sm:$0xff]
      %v580 = vld [vmem:[%s5 + $0x18] sm:$0xff]
      %v581 = vld [vmem:[%s5 + $0x20] sm:$0xff]
      %v582 = vld [vmem:[%s5 + $0x28] sm:$0xff]
      %v583 = vld [vmem:[%s5 + $0x30] sm:$0xff]
      %v584 = vld [vmem:[%s5 + $0x38] sm:$0xff]
      %v585 = vld [vmem:[%s5 + $0x40] sm:$0xff]
      %v586 = vld [vmem:[%s5 + $0x48] sm:$0xff]
      %v587 = vld [vmem:[%s5 + $0x50] sm:$0xff]
      %v588 = vld [vmem:[%s5 + $0x58] sm:$0xff]
      %v589 = vld [vmem:[%s5 + $0x60] sm:$0xff]
      %v590 = vld [vmem:[%s5 + $0x68] sm:$0xff]
      %v591 = vld [vmem:[%s5 + $0x70] sm:$0xff]
      %v592 = vld [vmem:[%s5 + $0x78] sm:$0xff]
      %v594 = vlaneseq
      %v595 = vshrl.u32 %v594, 7
      %v596 = vsub.s32 0, %v595
      %v597 = vrot.slane %v284, %v596
      %599 = vmatprep.subr.mxu0 0.0
      %600 = vmatpush1.msra.mxu0 %v577
      %601 = vmatprep.subr.mxu0 0.0
      %602 = vmatpush1.msra.mxu0 %v578
      %603 = vmatprep.subr.mxu0 0.0
      %604 = vmatpush1.msra.mxu0 %v579
      %605 = vmatprep.subr.mxu0 0.0
      %606 = vmatpush1.msra.mxu0 %v580
      %607 = vmatprep.subr.mxu0 0.0
      %608 = vmatpush1.msra.mxu0 %v581
      %609 = vmatprep.subr.mxu0 0.0
      %610 = vmatpush1.msra.mxu0 %v582
      %611 = vmatprep.subr.mxu0 0.0
      %612 = vmatpush1.msra.mxu0 %v583
      %613 = vmatprep.subr.mxu0 0.0
      %614 = vmatpush1.msra.mxu0 %v584
      %615 = vmatprep.subr.mxu0 0.0
      %616 = vmatpush1.msra.mxu0 %v585
      %617 = vmatprep.subr.mxu0 0.0
      %618 = vmatpush1.msra.mxu0 %v586
      %619 = vmatprep.subr.mxu0 0.0
      %620 = vmatpush1.msra.mxu0 %v587
      %621 = vmatprep.subr.mxu0 0.0
      %622 = vmatpush1.msra.mxu0 %v588
      %623 = vmatprep.subr.mxu0 0.0
      %624 = vmatpush1.msra.mxu0 %v589
      %625 = vmatprep.subr.mxu0 0.0
      %626 = vmatpush1.msra.mxu0 %v590
      %627 = vmatprep.subr.mxu0 0.0
      %628 = vmatpush1.msra.mxu0 %v591
      %629 = vmatprep.subr.mxu0 0.0
      %630 = vmatpush1.msra.mxu0 %v592
      %631 = vmatprep.subr.mxu0 0.0
      %632 = vmatpush1.msra.mxu0 0.0
      %633 = vmatprep.subr.mxu0 0.0
      %634 = vmatpush1.msra.mxu0 0.0
      %635 = vmatprep.subr.mxu0 0.0
      %636 = vmatpush1.msra.mxu0 0.0
      %637 = vmatprep.subr.mxu0 0.0
      %638 = vmatpush1.msra.mxu0 0.0
      %639 = vmatprep.subr.mxu0 0.0
      %640 = vmatpush1.msra.mxu0 0.0
      %641 = vmatprep.subr.mxu0 0.0
      %642 = vmatpush1.msra.mxu0 0.0
      %643 = vmatprep.subr.mxu0 0.0
      %644 = vmatpush1.msra.mxu0 0.0
      %645 = vmatprep.subr.mxu0 0.0
      %646 = vmatpush1.msra.mxu0 0.0
      %647 = vmatprep.subr.mxu0 0.0
      %648 = vmatpush1.msra.mxu0 0.0
      %649 = vmatprep.subr.mxu0 0.0
      %650 = vmatpush1.msra.mxu0 0.0
      %651 = vmatprep.subr.mxu0 0.0
      %652 = vmatpush1.msra.mxu0 0.0
      %653 = vmatprep.subr.mxu0 0.0
      %654 = vmatpush1.msra.mxu0 0.0
      %655 = vmatprep.subr.mxu0 0.0
      %656 = vmatpush1.msra.mxu0 0.0
      %657 = vmatprep.subr.mxu0 0.0
      %658 = vmatpush1.msra.mxu0 0.0
      %659 = vmatprep.subr.mxu0 0.0
      %660 = vmatpush1.msra.mxu0 0.0
      %661 = vmatprep.subr.mxu0 0.0
      %662 = vmatpush1.msra.mxu0 0.0
      %663 = vmatprep.mubr.f32.mxu0 0.0
      %664 = vmatmul.mubr.f32.gmra.mrb[0].mxu0 %v569
      %v665 = vpop.f32.mrb[0].mxu0
      %v666 = vadd.f32 %v597, %v665
      %v667 = vpop.f32.mrb[0].mxu0
      %668 = vmatprep.mubr.f32.mxu0 0.0
      %669 = vmatmul.mubr.f32.gmra.mrb[0].mxu0 %v570
      %v670 = vpop.f32.mrb[0].mxu0
      %v671 = vadd.f32 %v597, %v670
      %v672 = vpop.f32.mrb[0].mxu0
      %673 = vmatprep.mubr.f32.mxu0 0.0
      %674 = vmatmul.mubr.f32.gmra.mrb[0].mxu0 %v571
      %v675 = vpop.f32.mrb[0].mxu0
      %v676 = vadd.f32 %v597, %v675
      %v677 = vpop.f32.mrb[0].mxu0
      %678 = vmatprep.mubr.f32.mxu0 0.0
      %679 = vmatmul.mubr.f32.gmra.mrb[0].mxu0 %v572
      %v680 = vpop.f32.mrb[0].mxu0
      %v681 = vadd.f32 %v597, %v680
      %v682 = vpop.f32.mrb[0].mxu0
      %683 = vmatprep.mubr.f32.mxu0 0.0
      %684 = vmatmul.mubr.f32.gmra.mrb[0].mxu0 %v573
      %v685 = vpop.f32.mrb[0].mxu0
      %v686 = vadd.f32 %v597, %v685
      %v687 = vpop.f32.mrb[0].mxu0
      %688 = vmatprep.mubr.f32.mxu0 0.0
      %689 = vmatmul.mubr.f32.gmra.mrb[0].mxu0 %v574
      %v690 = vpop.f32.mrb[0].mxu0
      %v691 = vadd.f32 %v597, %v690
      %v692 = vpop.f32.mrb[0].mxu0
      %693 = vmatprep.mubr.f32.mxu0 0.0
      %694 = vmatmul.mubr.f32.gmra.mrb[0].mxu0 %v575
      %v695 = vpop.f32.mrb[0].mxu0
      %v696 = vadd.f32 %v597, %v695
      %v697 = vpop.f32.mrb[0].mxu0
      %698 = vmatprep.mubr.f32.mxu0 0.0
      %699 = vmatmul.mubr.f32.gmra.mrb[0].mxu0 %v576
      %v700 = vpop.f32.mrb[0].mxu0
      %v701 = vadd.f32 %v597, %v700
      %v702 = vpop.f32.mrb[0].mxu0
      %703 = vdwg.mxu0
      %vm704 = vcmask 15360
      %705 = vst.msk [vmem:[%s280] sm:$0xff] %vm704, %v666
      %706 = vst.msk [vmem:[%s280 + $0x8] sm:$0xff] %vm704, %v671
      %707 = vst.msk [vmem:[%s280 + $0x10] sm:$0xff] %vm704, %v676
      %708 = vst.msk [vmem:[%s280 + $0x18] sm:$0xff] %vm704, %v681
      %709 = vst.msk [vmem:[%s280 + $0x20] sm:$0xff] %vm704, %v686
      %710 = vst.msk [vmem:[%s280 + $0x28] sm:$0xff] %vm704, %v691
      %711 = vst.msk [vmem:[%s280 + $0x30] sm:$0xff] %vm704, %v696
      %712 = vst.msk [vmem:[%s280 + $0x38] sm:$0xff] %vm704, %v701
      %s713 = smul.u32 8, %s18
      %p714 = scmp.lt.s32.totalorder %s713, 31
      %s715 = scalar_select %p714, %s713, 31
      %s716 = smul.addr %s715, 8
      %s717 = scalar_lea.vmem %s7, %s716
      // Predicated region
      $region49: #{qnet_forward.1} parent=47 // pred_check
        %p718 = pneg %p188
      $region50: #{qnet_forward.1} parent=47 // pred_check_branch
        %720 = sbr.rel (%p718) target = $region52
      $region51: #{qnet_forward.1} parent=47 // pred_region
        %s721 = smul.u32 8, %s18
      $region52: #{qnet_forward.1} parent=47 // pred_fallthru
        _
    $region48: #{qnet_forward.1} parent=5 // pred_fallthru
      _
    %p722 = scmp.le.s32.totalorder 2, %s13
    // Predicated region
    $region53: #{qnet_forward.1} parent=5 // pred_check
      %p723 = pneg %p722
    $region54: #{qnet_forward.1} parent=5 // pred_check_branch
      %725 = sbr.rel (%p723) target = $region56
    $region55: #{qnet_forward.1} parent=5 // pred_region
      %s726 = ssub.s32 %s13, 2
      // Predicated region
      $region57: #{qnet_forward.1} parent=55 // pred_check
        %p727 = pneg %p194
      $region58: #{qnet_forward.1} parent=55 // pred_check_branch
        %729 = sbr.rel (%p727) target = $region60
      $region59: #{qnet_forward.1} parent=55 // pred_region
        %s730 = smul.u32 8, %s19
        %p731 = scmp.lt.s32.totalorder %s730, 31
        %s732 = scalar_select %p731, %s730, 31
        %s733 = smul.addr %s732, 8
        %s734 = scalar_lea.vmem %s7, %s733
      $region60: #{qnet_forward.1} parent=55 // pred_fallthru
        _
    $region56: #{qnet_forward.1} parent=5 // pred_fallthru
      _
  $region6: #{qnet_forward.1} parent=0 // loop_footer
    %s17 = sadd.s32 1, %s13
  $region7: #{qnet_forward.1} parent=0 // loop_footer_branch
    %12 = sbr.rel target = $region3
  $region8: #{qnet_forward.1} parent=0 // loop_exit
    _

</llo_original>
